<compile_context>
chip_gen: v5e
topology: v5e:2x2
jax: 0.10.0
libtpu: 0.0.40
codegen_flags: <defaults>
</compile_context>

<pallas_src>
import functools

import jax
import jax.numpy as jnp
from jax.experimental import pallas as pl
from jax.experimental.pallas import tpu as pltpu


def _round_up(x, m):
    return ((x + m - 1) // m) * m


def gnosis_kernel(x_ref, w1_ref, b1_ref, w2_ref, b2_ref,
                  w3_ref, b3_ref, w4_ref, b4_ref, o_ref, *, sub_rows):
    # Weights/biases are small and grid-invariant: load once per grid step.
    w1 = w1_ref[...]; b1 = b1_ref[...]
    w2 = w2_ref[...]; b2 = b2_ref[...]
    w3 = w3_ref[...]; b3 = b3_ref[...]
    w4 = w4_ref[...]; b4 = b4_ref[...]

    def mlp(xv):
        # xv is bf16; MXU takes bf16 operands, accumulates in f32.
        h = jnp.tanh(jnp.dot(xv, w1, preferred_element_type=jnp.float32) + b1)
        h = jnp.tanh(jnp.dot(h.astype(jnp.bfloat16), w2,
                             preferred_element_type=jnp.float32) + b2)
        h = jnp.tanh(jnp.dot(h.astype(jnp.bfloat16), w3,
                             preferred_element_type=jnp.float32) + b3)
        # TODO(synk): dropout3 implemented as eval-mode identity; training-mode
        # dropout would use pltpu.prng_seed / pltpu.prng_random_bits + 1/(1-p).
        return jnp.tanh(jnp.dot(h.astype(jnp.bfloat16), w4,
                                preferred_element_type=jnp.float32) + b4)

    rows = x_ref.shape[0]
    if rows <= sub_rows or rows % sub_rows != 0:
        # Small tile: straight-line body.
        o_ref[...] = mlp(x_ref[...]).astype(o_ref.dtype)
    else:
        # Large tile: cap live activation size to sub_rows rows per pass.
        def body(s, carry):
            r = pl.multiple_of(s * sub_rows, sub_rows)
            o_ref[pl.ds(r, sub_rows), :] = mlp(
                x_ref[pl.ds(r, sub_rows), :]).astype(o_ref.dtype)
            return carry
        jax.lax.fori_loop(0, rows // sub_rows, body, 0, unroll=True)


def _choose_block_b(batch, requested):
    bb = min(requested, batch)
    if bb == batch:
        return batch                       # single full-extent tile is always legal
    return max(8, (bb // 8) * 8)           # sublane-aligned tile, grid masks the tail


@functools.partial(jax.jit, static_argnames=("block_b",))
def gnosis_forward(x, params, *, block_b=512):
    """Fused Gnosis forward. x: [B, in_size] f32, returns [B, out_size] f32."""
    w1, b1, w2, b2, w3, b3, w4, b4 = params
    B, in_size = x.shape
    out_size = w4.shape[1]
    out_pad = _round_up(out_size, 128)

    # Lane-dense output: zero-pad final layer to a multiple of 128 lanes.
    if out_pad != out_size:
        w4 = jnp.pad(w4, ((0, 0), (0, out_pad - out_size)))
        b4 = jnp.pad(b4, ((0, 0), (0, out_pad - out_size)))

    # bf16 MXU operands; biases stay f32 (added to the f32 accumulator).
    xb = x.astype(jnp.bfloat16)
    ws = [w.astype(jnp.bfloat16) for w in (w1, w2, w3, w4)]
    bs = [b.astype(jnp.float32) for b in (b1, b2, b3, b4)]

    bb = _choose_block_b(B, block_b)
    grid = (pl.cdiv(B, bb),)

    x_spec = pl.BlockSpec((bb, in_size), lambda i: (i, 0))
    o_spec = pl.BlockSpec((bb, out_pad), lambda i: (i, 0))

    def full_spec(a):
        return pl.BlockSpec(a.shape, lambda i: (0,) * a.ndim)

    in_specs = [x_spec]
    operands = [xb]
    for w, b in zip(ws, bs):
        in_specs += [full_spec(w), full_spec(b)]
        operands += [w, b]

    out = pl.pallas_call(
        functools.partial(gnosis_kernel, sub_rows=128),
        out_shape=jax.ShapeDtypeStruct((B, out_pad), jnp.float32),
        grid_spec=pltpu.PrefetchScalarGridSpec(
            num_scalar_prefetch=0,
            grid=grid,
            in_specs=in_specs,
            out_specs=o_spec,
        ),
        compiler_params=pltpu.CompilerParams(
            dimension_semantics=("parallel",)),
    )(*operands)
    return out[:, :out_size]


def init_gnosis_params(key, in_size, out_size, hidden_size):
    """nn.Linear-style init (uniform +/- 1/sqrt(fan_in)).
    Weights stored as [fan_in, fan_out]; biases as [1, fan_out]."""
    dims = [(in_size, hidden_size),
            (hidden_size, hidden_size),
            (hidden_size, hidden_size),
            (hidden_size, out_size)]
    params = []
    for (fi, fo) in dims:
        key, kw, kb = jax.random.split(key, 3)
        bound = 1.0 / jnp.sqrt(fi)
        w = jax.random.uniform(kw, (fi, fo), jnp.float32, -bound, bound)
        b = jax.random.uniform(kb, (1, fo), jnp.float32, -bound, bound)
        params += [w, b]
    return tuple(params)


def gnosis_reference(x, params):
    """Pure-f32 reference of the PyTorch forward (dropout in eval mode)."""
    w1, b1, w2, b2, w3, b3, w4, b4 = params
    h = jnp.tanh(x @ w1 + b1)
    h = jnp.tanh(h @ w2 + b2)
    h = jnp.tanh(h @ w3 + b3)
    return jnp.tanh(h @ w4 + b4)


if __name__ == "__main__":
    key = jax.random.PRNGKey(0)
    in_size, hidden_size, out_size = 32, 128, 8
    batch = 16

    kx, kp = jax.random.split(key)
    x = jax.random.normal(kx, (batch, in_size), jnp.float32)
    params = init_gnosis_params(kp, in_size, out_size, hidden_size)

    out = gnosis_forward(x, params)
    out = jax.block_until_ready(out)

    ref = gnosis_reference(x, params)
    assert out.shape == (batch, out_size)
    # bf16 MXU operands -> loosened tolerance vs. the f32 reference.
    assert jnp.allclose(out, ref, atol=5e-2, rtol=0.0), (
        float(jnp.max(jnp.abs(out - ref))))
    print("KERNEL_OK")
</pallas_src>

<mosaic_0001>
module attributes {stable_mosaic.version = 11 : i64} {
  func.func @gnosis_kernel(%arg0: i32, %arg1: memref<16x32xbf16, #tpu.memory_space<vmem>>, %arg2: memref<32x128xbf16, #tpu.memory_space<vmem>>, %arg3: memref<1x128xf32, #tpu.memory_space<vmem>>, %arg4: memref<128x128xbf16, #tpu.memory_space<vmem>>, %arg5: memref<1x128xf32, #tpu.memory_space<vmem>>, %arg6: memref<128x128xbf16, #tpu.memory_space<vmem>>, %arg7: memref<1x128xf32, #tpu.memory_space<vmem>>, %arg8: memref<128x128xbf16, #tpu.memory_space<vmem>>, %arg9: memref<1x128xf32, #tpu.memory_space<vmem>>, %arg10: memref<16x128xf32, #tpu.memory_space<vmem>>) attributes {dimension_semantics = [#tpu.dimension_semantics<parallel>], iteration_bounds = array<i64: 1>, scalar_prefetch = 0 : i64, scratch_operands = 0 : i64, tpu.core_type = #tpu.core_type<tc>, window_params = [{transform_indices = @transform_0, window_bounds = array<i64: 16, 32>}, {pipeline_mode = #tpu.pipeline_mode<synchronous>, transform_indices = @transform_1, window_bounds = array<i64: 32, 128>}, {pipeline_mode = #tpu.pipeline_mode<synchronous>, transform_indices = @transform_2, window_bounds = array<i64: 1, 128>}, {pipeline_mode = #tpu.pipeline_mode<synchronous>, transform_indices = @transform_3, window_bounds = array<i64: 128, 128>}, {pipeline_mode = #tpu.pipeline_mode<synchronous>, transform_indices = @transform_4, window_bounds = array<i64: 1, 128>}, {pipeline_mode = #tpu.pipeline_mode<synchronous>, transform_indices = @transform_5, window_bounds = array<i64: 128, 128>}, {pipeline_mode = #tpu.pipeline_mode<synchronous>, transform_indices = @transform_6, window_bounds = array<i64: 1, 128>}, {pipeline_mode = #tpu.pipeline_mode<synchronous>, transform_indices = @transform_7, window_bounds = array<i64: 128, 128>}, {pipeline_mode = #tpu.pipeline_mode<synchronous>, transform_indices = @transform_8, window_bounds = array<i64: 1, 128>}, {transform_indices = @transform_9, window_bounds = array<i64: 16, 128>}]} {
    %c0 = arith.constant 0 : index
    %c0_0 = arith.constant 0 : index
    %0 = vector.load %arg2[%c0, %c0_0] : memref<32x128xbf16, #tpu.memory_space<vmem>>, vector<32x128xbf16>
    %c0_1 = arith.constant 0 : index
    %c0_2 = arith.constant 0 : index
    %1 = vector.load %arg3[%c0_1, %c0_2] : memref<1x128xf32, #tpu.memory_space<vmem>>, vector<1x128xf32>
    %c0_3 = arith.constant 0 : index
    %c0_4 = arith.constant 0 : index
    %2 = vector.load %arg4[%c0_3, %c0_4] : memref<128x128xbf16, #tpu.memory_space<vmem>>, vector<128x128xbf16>
    %c0_5 = arith.constant 0 : index
    %c0_6 = arith.constant 0 : index
    %3 = vector.load %arg5[%c0_5, %c0_6] : memref<1x128xf32, #tpu.memory_space<vmem>>, vector<1x128xf32>
    %c0_7 = arith.constant 0 : index
    %c0_8 = arith.constant 0 : index
    %4 = vector.load %arg6[%c0_7, %c0_8] : memref<128x128xbf16, #tpu.memory_space<vmem>>, vector<128x128xbf16>
    %c0_9 = arith.constant 0 : index
    %c0_10 = arith.constant 0 : index
    %5 = vector.load %arg7[%c0_9, %c0_10] : memref<1x128xf32, #tpu.memory_space<vmem>>, vector<1x128xf32>
    %c0_11 = arith.constant 0 : index
    %c0_12 = arith.constant 0 : index
    %6 = vector.load %arg8[%c0_11, %c0_12] : memref<128x128xbf16, #tpu.memory_space<vmem>>, vector<128x128xbf16>
    %c0_13 = arith.constant 0 : index
    %c0_14 = arith.constant 0 : index
    %7 = vector.load %arg9[%c0_13, %c0_14] : memref<1x128xf32, #tpu.memory_space<vmem>>, vector<1x128xf32>
    %c0_15 = arith.constant 0 : index
    %c0_16 = arith.constant 0 : index
    %8 = vector.load %arg1[%c0_15, %c0_16] : memref<16x32xbf16, #tpu.memory_space<vmem>>, vector<16x32xbf16>
    %cst = arith.constant dense<0.000000e+00> : vector<16x128xf32>
    %9 = tpu.matmul %8, %0, %cst {dimension_numbers = #tpu.dot_dimension_numbers<[1], [0], [0], [1], [0, 0, 1, 1], [], []>} : vector<16x32xbf16>, vector<32x128xbf16>, vector<16x128xf32> -> vector<16x128xf32>
    %10 = vector.broadcast %1 : vector<1x128xf32> to vector<16x128xf32>
    %11 = arith.addf %9, %10 : vector<16x128xf32>
    %12 = math.tanh %11 : vector<16x128xf32>
    %13 = arith.truncf %12 : vector<16x128xf32> to vector<16x128xbf16>
    %cst_17 = arith.constant dense<0.000000e+00> : vector<16x128xf32>
    %14 = tpu.matmul %13, %2, %cst_17 {dimension_numbers = #tpu.dot_dimension_numbers<[1], [0], [0], [1], [0, 0, 1, 1], [], []>} : vector<16x128xbf16>, vector<128x128xbf16>, vector<16x128xf32> -> vector<16x128xf32>
    %15 = vector.broadcast %3 : vector<1x128xf32> to vector<16x128xf32>
    %16 = arith.addf %14, %15 : vector<16x128xf32>
    %17 = math.tanh %16 : vector<16x128xf32>
    %18 = arith.truncf %17 : vector<16x128xf32> to vector<16x128xbf16>
    %cst_18 = arith.constant dense<0.000000e+00> : vector<16x128xf32>
    %19 = tpu.matmul %18, %4, %cst_18 {dimension_numbers = #tpu.dot_dimension_numbers<[1], [0], [0], [1], [0, 0, 1, 1], [], []>} : vector<16x128xbf16>, vector<128x128xbf16>, vector<16x128xf32> -> vector<16x128xf32>
    %20 = vector.broadcast %5 : vector<1x128xf32> to vector<16x128xf32>
    %21 = arith.addf %19, %20 : vector<16x128xf32>
    %22 = math.tanh %21 : vector<16x128xf32>
    %23 = arith.truncf %22 : vector<16x128xf32> to vector<16x128xbf16>
    %cst_19 = arith.constant dense<0.000000e+00> : vector<16x128xf32>
    %24 = tpu.matmul %23, %6, %cst_19 {dimension_numbers = #tpu.dot_dimension_numbers<[1], [0], [0], [1], [0, 0, 1, 1], [], []>} : vector<16x128xbf16>, vector<128x128xbf16>, vector<16x128xf32> -> vector<16x128xf32>
    %25 = vector.broadcast %7 : vector<1x128xf32> to vector<16x128xf32>
    %26 = arith.addf %24, %25 : vector<16x128xf32>
    %27 = math.tanh %26 : vector<16x128xf32>
    %c0_20 = arith.constant 0 : index
    %c0_21 = arith.constant 0 : index
    %28 = vector.load %arg10[%c0_20, %c0_21] : memref<16x128xf32, #tpu.memory_space<vmem>>, vector<16x128xf32>
    tpu.vector_store %arg10[%c0_20, %c0_21], %27 {strides = array<i32>} : memref<16x128xf32, #tpu.memory_space<vmem>>, vector<16x128xf32>,
    return
  }
  func.func @transform_0(%arg0: i32) -> (i32, i32) {
    %c0_i32 = arith.constant 0 : i32
    %c0_i32_0 = arith.constant 0 : i32
    return %arg0, %c0_i32 : i32, i32
  }
  func.func @transform_1(%arg0: i32) -> (i32, i32) {
    %c0_i32 = arith.constant 0 : i32
    %c0_i32_0 = arith.constant 0 : i32
    %c0_i32_1 = arith.constant 0 : i32
    return %c0_i32, %c0_i32_0 : i32, i32
  }
  func.func @transform_2(%arg0: i32) -> (i32, i32) {
    %c0_i32 = arith.constant 0 : i32
    %c0_i32_0 = arith.constant 0 : i32
    %c0_i32_1 = arith.constant 0 : i32
    return %c0_i32, %c0_i32_0 : i32, i32
  }
  func.func @transform_3(%arg0: i32) -> (i32, i32) {
    %c0_i32 = arith.constant 0 : i32
    %c0_i32_0 = arith.constant 0 : i32
    %c0_i32_1 = arith.constant 0 : i32
    return %c0_i32, %c0_i32_0 : i32, i32
  }
  func.func @transform_4(%arg0: i32) -> (i32, i32) {
    %c0_i32 = arith.constant 0 : i32
    %c0_i32_0 = arith.constant 0 : i32
    %c0_i32_1 = arith.constant 0 : i32
    return %c0_i32, %c0_i32_0 : i32, i32
  }
  func.func @transform_5(%arg0: i32) -> (i32, i32) {
    %c0_i32 = arith.constant 0 : i32
    %c0_i32_0 = arith.constant 0 : i32
    %c0_i32_1 = arith.constant 0 : i32
    return %c0_i32, %c0_i32_0 : i32, i32
  }
  func.func @transform_6(%arg0: i32) -> (i32, i32) {
    %c0_i32 = arith.constant 0 : i32
    %c0_i32_0 = arith.constant 0 : i32
    %c0_i32_1 = arith.constant 0 : i32
    return %c0_i32, %c0_i32_0 : i32, i32
  }
  func.func @transform_7(%arg0: i32) -> (i32, i32) {
    %c0_i32 = arith.constant 0 : i32
    %c0_i32_0 = arith.constant 0 : i32
    %c0_i32_1 = arith.constant 0 : i32
    return %c0_i32, %c0_i32_0 : i32, i32
  }
  func.func @transform_8(%arg0: i32) -> (i32, i32) {
    %c0_i32 = arith.constant 0 : i32
    %c0_i32_0 = arith.constant 0 : i32
    %c0_i32_1 = arith.constant 0 : i32
    return %c0_i32, %c0_i32_0 : i32, i32
  }
  func.func @transform_9(%arg0: i32) -> (i32, i32) {
    %c0_i32 = arith.constant 0 : i32
    %c0_i32_0 = arith.constant 0 : i32
    return %arg0, %c0_i32 : i32, i32
  }
}

</mosaic_0001>

<llo_original>
// kernel: gnosis_forward.1
$region0: #{gnosis_forward.1}
  #allocation0 [shape = 'u32[]', space=smem, size = 0x4, offset = 0x4, fixed_abs, tag = 'smem constant byte address 0x4 - core index']
  #allocation1 [shape = 'u32[72,128]{1,0:T(1,128)}', space=vmem, size = 0x9000, scoped, tag = 'internal scratch']
  %s0 = inlined_call_operand.vmem [shape: bf16[16,32], index: 0, kind: input, shape index: {}]
  %s1 = inlined_call_operand.vmem [shape: bf16[32,128], index: 1, kind: input, shape index: {}]
  %s2 = inlined_call_operand.vmem [shape: f32[1,128], index: 2, kind: input, shape index: {}]
  %s3 = inlined_call_operand.vmem [shape: bf16[128,128], index: 3, kind: input, shape index: {}]
  %s4 = inlined_call_operand.vmem [shape: f32[1,128], index: 4, kind: input, shape index: {}]
  %s5 = inlined_call_operand.vmem [shape: bf16[128,128], index: 5, kind: input, shape index: {}]
  %s6 = inlined_call_operand.vmem [shape: f32[1,128], index: 6, kind: input, shape index: {}]
  %s7 = inlined_call_operand.vmem [shape: bf16[128,128], index: 7, kind: input, shape index: {}]
  %s8 = inlined_call_operand.vmem [shape: f32[1,128], index: 8, kind: input, shape index: {}]
  %s9 = inlined_call_operand.vmem [shape: f32[16,128], index: 9, kind: output, shape index: {}]
  %s10 = sld [smem:[#allocation0]]
  $region46: #{gnosis_forward.1} parent=0
    _
  %s12 = ssub.s32 1, %s10
  %s13 = scalar_select 0, %s12, %s10
  // Predicated region
  $region2: #{gnosis_forward.1} parent=0 // pred_check
    _
  $region3: #{gnosis_forward.1} parent=0 // pred_check_branch
    %15 = sbr.rel (0) target = $region5
  $region4: #{gnosis_forward.1} parent=0 // pred_region
    _
  $region5: #{gnosis_forward.1} parent=0 // pred_fallthru
    _
  // Predicated region
  $region6: #{gnosis_forward.1} parent=0 // pred_check
    _
  $region7: #{gnosis_forward.1} parent=0 // pred_check_branch
    %17 = sbr.rel (0) target = $region9
  $region8: #{gnosis_forward.1} parent=0 // pred_region
    _
  $region9: #{gnosis_forward.1} parent=0 // pred_fallthru
    _
  // Predicated region
  $region10: #{gnosis_forward.1} parent=0 // pred_check
    _
  $region11: #{gnosis_forward.1} parent=0 // pred_check_branch
    %19 = sbr.rel (0) target = $region13
  $region12: #{gnosis_forward.1} parent=0 // pred_region
    _
  $region13: #{gnosis_forward.1} parent=0 // pred_fallthru
    _
  // Predicated region
  $region14: #{gnosis_forward.1} parent=0 // pred_check
    _
  $region15: #{gnosis_forward.1} parent=0 // pred_check_branch
    %21 = sbr.rel (0) target = $region17
  $region16: #{gnosis_forward.1} parent=0 // pred_region
    _
  $region17: #{gnosis_forward.1} parent=0 // pred_fallthru
    _
  // Predicated region
  $region18: #{gnosis_forward.1} parent=0 // pred_check
    _
  $region19: #{gnosis_forward.1} parent=0 // pred_check_branch
    %23 = sbr.rel (0) target = $region21
  $region20: #{gnosis_forward.1} parent=0 // pred_region
    _
  $region21: #{gnosis_forward.1} parent=0 // pred_fallthru
    _
  // Predicated region
  $region22: #{gnosis_forward.1} parent=0 // pred_check
    _
  $region23: #{gnosis_forward.1} parent=0 // pred_check_branch
    %25 = sbr.rel (0) target = $region25
  $region24: #{gnosis_forward.1} parent=0 // pred_region
    _
  $region25: #{gnosis_forward.1} parent=0 // pred_fallthru
    _
  // Predicated region
  $region26: #{gnosis_forward.1} parent=0 // pred_check
    _
  $region27: #{gnosis_forward.1} parent=0 // pred_check_branch
    %27 = sbr.rel (0) target = $region29
  $region28: #{gnosis_forward.1} parent=0 // pred_region
    _
  $region29: #{gnosis_forward.1} parent=0 // pred_fallthru
    _
  // Predicated region
  $region30: #{gnosis_forward.1} parent=0 // pred_check
    _
  $region31: #{gnosis_forward.1} parent=0 // pred_check_branch
    %29 = sbr.rel (0) target = $region33
  $region32: #{gnosis_forward.1} parent=0 // pred_region
    _
  $region33: #{gnosis_forward.1} parent=0 // pred_fallthru
    _
  // Predicated region
  $region34: #{gnosis_forward.1} parent=0 // pred_check
    _
  $region35: #{gnosis_forward.1} parent=0 // pred_check_branch
    %31 = sbr.rel (0) target = $region37
  $region36: #{gnosis_forward.1} parent=0 // pred_region
    _
  $region37: #{gnosis_forward.1} parent=0 // pred_fallthru
    _
  %v33 = vld [vmem:[%s1] sm:$0xf]
  %v34 = vld [vmem:[%s1 + $0x4] sm:$0xf]
  %v35 = vld [vmem:[%s1 + $0x8] sm:$0xf]
  %v36 = vld [vmem:[%s1 + $0xc] sm:$0xf]
  %v37 = vld [vmem:[%s2] sm:$0x1]
  %v38 = vld [vmem:[%s3] sm:$0xf]
  %v39 = vld [vmem:[%s3 + $0x4] sm:$0xf]
  %v40 = vld [vmem:[%s3 + $0x8] sm:$0xf]
  %v41 = vld [vmem:[%s3 + $0xc] sm:$0xf]
  %v42 = vld [vmem:[%s3 + $0x10] sm:$0xf]
  %v43 = vld [vmem:[%s3 + $0x14] sm:$0xf]
  %v44 = vld [vmem:[%s3 + $0x18] sm:$0xf]
  %v45 = vld [vmem:[%s3 + $0x1c] sm:$0xf]
  %v46 = vld [vmem:[%s3 + $0x20] sm:$0xf]
  %v47 = vld [vmem:[%s3 + $0x24] sm:$0xf]
  %v48 = vld [vmem:[%s3 + $0x28] sm:$0xf]
  %v49 = vld [vmem:[%s3 + $0x2c] sm:$0xf]
  %v50 = vld [vmem:[%s3 + $0x30] sm:$0xf]
  %v51 = vld [vmem:[%s3 + $0x34] sm:$0xf]
  %v52 = vld [vmem:[%s3 + $0x38] sm:$0xf]
  %v53 = vld [vmem:[%s3 + $0x3c] sm:$0xf]
  %v54 = vld [vmem:[%s4] sm:$0x1]
  %v55 = vld [vmem:[%s5] sm:$0xf]
  %v56 = vld [vmem:[%s5 + $0x4] sm:$0xf]
  %v57 = vld [vmem:[%s5 + $0x8] sm:$0xf]
  %v58 = vld [vmem:[%s5 + $0xc] sm:$0xf]
  %v59 = vld [vmem:[%s5 + $0x10] sm:$0xf]
  %v60 = vld [vmem:[%s5 + $0x14] sm:$0xf]
  %v61 = vld [vmem:[%s5 + $0x18] sm:$0xf]
  %v62 = vld [vmem:[%s5 + $0x1c] sm:$0xf]
  %v63 = vld [vmem:[%s5 + $0x20] sm:$0xf]
  %v64 = vld [vmem:[%s5 + $0x24] sm:$0xf]
  %v65 = vld [vmem:[%s5 + $0x28] sm:$0xf]
  %v66 = vld [vmem:[%s5 + $0x2c] sm:$0xf]
  %v67 = vld [vmem:[%s5 + $0x30] sm:$0xf]
  %v68 = vld [vmem:[%s5 + $0x34] sm:$0xf]
  %v69 = vld [vmem:[%s5 + $0x38] sm:$0xf]
  %v70 = vld [vmem:[%s5 + $0x3c] sm:$0xf]
  %v71 = vld [vmem:[%s6] sm:$0x1]
  %v72 = vld [vmem:[%s7] sm:$0xf]
  %v73 = vld [vmem:[%s7 + $0x4] sm:$0xf]
  %v74 = vld [vmem:[%s7 + $0x8] sm:$0xf]
  %v75 = vld [vmem:[%s7 + $0xc] sm:$0xf]
  %v76 = vld [vmem:[%s7 + $0x10] sm:$0xf]
  %v77 = vld [vmem:[%s7 + $0x14] sm:$0xf]
  %v78 = vld [vmem:[%s7 + $0x18] sm:$0xf]
  %v79 = vld [vmem:[%s7 + $0x1c] sm:$0xf]
  %v80 = vld [vmem:[%s7 + $0x20] sm:$0xf]
  %v81 = vld [vmem:[%s7 + $0x24] sm:$0xf]
  %v82 = vld [vmem:[%s7 + $0x28] sm:$0xf]
  %v83 = vld [vmem:[%s7 + $0x2c] sm:$0xf]
  %v84 = vld [vmem:[%s7 + $0x30] sm:$0xf]
  %v85 = vld [vmem:[%s7 + $0x34] sm:$0xf]
  %v86 = vld [vmem:[%s7 + $0x38] sm:$0xf]
  %v87 = vld [vmem:[%s7 + $0x3c] sm:$0xf]
  %v88 = vld [vmem:[%s8] sm:$0x1]
  %v89 = vld [vmem:[%s0] sm:$0xf]
  %v90 = vld [vmem:[%s0 + $0x4] sm:$0xf]
  %v92 = vperm.slane %v37, 0
  %v96 = vunpack.c.l.b16 %v89
  %v97 = vunpack.c.l.b16 %v90
  %v98 = vpack.c.b16 %v97, %v96
  %v103 = vunpack.c.l.b16 %v33
  %v104 = vunpack.c.l.b16 %v34
  %v105 = vunpack.c.l.b16 %v35
  %v106 = vunpack.c.l.b16 %v36
  %v107 = vpack.c.b16 %v104, %v103
  %v108 = vpack.c.b16 %v106, %v105
  %vm111 = vcmask 261120
  %v113 = vsel %vm111, %v98, 0
  %115 = vmatpush.bf16.msra.mxu0 0
  %116 = vmatpush.bf16.msra.mxu0 0
  %117 = vmatpush.bf16.msra.mxu0 0
  %118 = vmatpush.bf16.msra.mxu0 0
  %119 = vmatpush.bf16.msra.mxu0 0
  %120 = vmatpush.bf16.msra.mxu0 0
  %121 = vmatpush.bf16.msra.mxu0 %v108
  %122 = vmatpush.bf16.msra.mxu0 %v107
  %123 = vmatmul.bf16.gmra.mxu0 %v113
  %v124 = vpop.f32.mrf.mxu0
  %v125 = vadd.f32 %v92, %v124
  %v126 = vpop.f32.mrf.mxu0
  %v127 = vadd.f32 %v92, %v126
  %128 = vdwg.mxu0
  %v129 = vtanh.pop %v125
  %v130 = vtanh.pop %v127
  %v131 = vpack.c.bf16 %v130, %v129
  %v133 = vperm.slane %v54, 0
  %v151 = vunpack.c.l.b16 %v38
  %v152 = vunpack.c.l.b16 %v39
  %v153 = vunpack.c.l.b16 %v40
  %v154 = vunpack.c.l.b16 %v41
  %v155 = vunpack.c.l.b16 %v42
  %v156 = vunpack.c.l.b16 %v43
  %v157 = vunpack.c.l.b16 %v44
  %v158 = vunpack.c.l.b16 %v45
  %v159 = vunpack.c.l.b16 %v46
  %v160 = vunpack.c.l.b16 %v47
  %v161 = vunpack.c.l.b16 %v48
  %v162 = vunpack.c.l.b16 %v49
  %v163 = vunpack.c.l.b16 %v50
  %v164 = vunpack.c.l.b16 %v51
  %v165 = vunpack.c.l.b16 %v52
  %v166 = vunpack.c.l.b16 %v53
  %v167 = vpack.c.b16 %v152, %v151
  %v168 = vpack.c.b16 %v154, %v153
  %v169 = vpack.c.b16 %v156, %v155
  %v170 = vpack.c.b16 %v158, %v157
  %v171 = vpack.c.b16 %v160, %v159
  %v172 = vpack.c.b16 %v162, %v161
  %v173 = vpack.c.b16 %v164, %v163
  %v174 = vpack.c.b16 %v166, %v165
  %183 = vmatpush.bf16.msra.mxu0 %v174
  %184 = vmatpush.bf16.msra.mxu0 %v173
  %185 = vmatpush.bf16.msra.mxu0 %v172
  %186 = vmatpush.bf16.msra.mxu0 %v171
  %187 = vmatpush.bf16.msra.mxu0 %v170
  %188 = vmatpush.bf16.msra.mxu0 %v169
  %189 = vmatpush.bf16.msra.mxu0 %v168
  %190 = vmatpush.bf16.msra.mxu0 %v167
  %191 = vmatmul.bf16.gmra.mxu0 %v131
  %v192 = vpop.f32.mrf.mxu0
  %v193 = vadd.f32 %v133, %v192
  %v194 = vpop.f32.mrf.mxu0
  %v195 = vadd.f32 %v133, %v194
  %196 = vdwg.mxu0
  %v197 = vtanh.pop %v193
  %v198 = vtanh.pop %v195
  %v199 = vpack.c.bf16 %v198, %v197
  %v201 = vperm.slane %v71, 0
  %v219 = vunpack.c.l.b16 %v55
  %v220 = vunpack.c.l.b16 %v56
  %v221 = vunpack.c.l.b16 %v57
  %v222 = vunpack.c.l.b16 %v58
  %v223 = vunpack.c.l.b16 %v59
  %v224 = vunpack.c.l.b16 %v60
  %v225 = vunpack.c.l.b16 %v61
  %v226 = vunpack.c.l.b16 %v62
  %v227 = vunpack.c.l.b16 %v63
  %v228 = vunpack.c.l.b16 %v64
  %v229 = vunpack.c.l.b16 %v65
  %v230 = vunpack.c.l.b16 %v66
  %v231 = vunpack.c.l.b16 %v67
  %v232 = vunpack.c.l.b16 %v68
  %v233 = vunpack.c.l.b16 %v69
  %v234 = vunpack.c.l.b16 %v70
  %v235 = vpack.c.b16 %v220, %v219
  %v236 = vpack.c.b16 %v222, %v221
  %v237 = vpack.c.b16 %v224, %v223
  %v238 = vpack.c.b16 %v226, %v225
  %v239 = vpack.c.b16 %v228, %v227
  %v240 = vpack.c.b16 %v230, %v229
  %v241 = vpack.c.b16 %v232, %v231
  %v242 = vpack.c.b16 %v234, %v233
  %251 = vmatpush.bf16.msra.mxu0 %v242
  %252 = vmatpush.bf16.msra.mxu0 %v241
  %253 = vmatpush.bf16.msra.mxu0 %v240
  %254 = vmatpush.bf16.msra.mxu0 %v239
  %255 = vmatpush.bf16.msra.mxu0 %v238
  %256 = vmatpush.bf16.msra.mxu0 %v237
  %257 = vmatpush.bf16.msra.mxu0 %v236
  %258 = vmatpush.bf16.msra.mxu0 %v235
  %259 = vmatmul.bf16.gmra.mxu0 %v199
  %v260 = vpop.f32.mrf.mxu0
  %v261 = vadd.f32 %v201, %v260
  %v262 = vpop.f32.mrf.mxu0
  %v263 = vadd.f32 %v201, %v262
  %264 = vdwg.mxu0
  %v265 = vtanh.pop %v261
  %v266 = vtanh.pop %v263
  %v267 = vpack.c.bf16 %v266, %v265
  %v269 = vperm.slane %v88, 0
  %v287 = vunpack.c.l.b16 %v72
  %v288 = vunpack.c.l.b16 %v73
  %v289 = vunpack.c.l.b16 %v74
  %v290 = vunpack.c.l.b16 %v75
  %v291 = vunpack.c.l.b16 %v76
  %v292 = vunpack.c.l.b16 %v77
  %v293 = vunpack.c.l.b16 %v78
  %v294 = vunpack.c.l.b16 %v79
  %v295 = vunpack.c.l.b16 %v80
  %v296 = vunpack.c.l.b16 %v81
  %v297 = vunpack.c.l.b16 %v82
  %v298 = vunpack.c.l.b16 %v83
  %v299 = vunpack.c.l.b16 %v84
  %v300 = vunpack.c.l.b16 %v85
  %v301 = vunpack.c.l.b16 %v86
  %v302 = vunpack.c.l.b16 %v87
  %v303 = vpack.c.b16 %v288, %v287
  %v304 = vpack.c.b16 %v290, %v289
  %v305 = vpack.c.b16 %v292, %v291
  %v306 = vpack.c.b16 %v294, %v293
  %v307 = vpack.c.b16 %v296, %v295
  %v308 = vpack.c.b16 %v298, %v297
  %v309 = vpack.c.b16 %v300, %v299
  %v310 = vpack.c.b16 %v302, %v301
  %319 = vmatpush.bf16.msra.mxu0 %v310
  %320 = vmatpush.bf16.msra.mxu0 %v309
  %321 = vmatpush.bf16.msra.mxu0 %v308
  %322 = vmatpush.bf16.msra.mxu0 %v307
  %323 = vmatpush.bf16.msra.mxu0 %v306
  %324 = vmatpush.bf16.msra.mxu0 %v305
  %325 = vmatpush.bf16.msra.mxu0 %v304
  %326 = vmatpush.bf16.msra.mxu0 %v303
  %327 = vmatmul.bf16.gmra.mxu0 %v267
  %v328 = vpop.f32.mrf.mxu0
  %v329 = vadd.f32 %v269, %v328
  %v330 = vpop.f32.mrf.mxu0
  %v331 = vadd.f32 %v269, %v330
  %332 = vdwg.mxu0
  %v333 = vtanh.pop %v329
  %v334 = vtanh.pop %v331
  %335 = vst [vmem:[%s9] sm:$0xff] %v333
  %336 = vst [vmem:[%s9 + $0x8] sm:$0xff] %v334
  // Predicated region
  $region38: #{gnosis_forward.1} parent=0 // pred_check
    _
  $region39: #{gnosis_forward.1} parent=0 // pred_check_branch
    %338 = sbr.rel (0) target = $region41
  $region40: #{gnosis_forward.1} parent=0 // pred_region
    _
  $region41: #{gnosis_forward.1} parent=0 // pred_fallthru
    _
  // Predicated region
  $region42: #{gnosis_forward.1} parent=0 // pred_check
    _
  $region43: #{gnosis_forward.1} parent=0 // pred_check_branch
    %340 = sbr.rel (0) target = $region45
  $region44: #{gnosis_forward.1} parent=0 // pred_region
    _
  $region45: #{gnosis_forward.1} parent=0 // pred_fallthru
    _

</llo_original>
